<compile_context>
chip_gen: v6e
topology: v6e:2x2x1
jax: 0.10.0
libtpu: 0.0.40
codegen_flags: <defaults>
</compile_context>

<pallas_src>
import jax
import jax.numpy as jnp
from jax.experimental import pallas as pl
from jax.experimental.pallas import tpu as pltpu


def _clip_ce_partial_kernel(img_row_ref, txt_row_ref, img_diag_ref,
                            txt_diag_ref, out_ref):
    """Per-row-tile partial sum of the two diagonal-label cross entropies."""
    tm = img_diag_ref.shape[0]
    row = jax.lax.broadcasted_iota(jnp.int32, (tm, tm), 0)
    col = jax.lax.broadcasted_iota(jnp.int32, (tm, tm), 1)
    diag_mask = row == col

    def ce_partial_sum(row_ref, diag_ref):
        logits = row_ref[...].astype(jnp.float32)                     # (TM, N)
        m = jnp.max(logits, axis=-1, keepdims=True)                   # (TM, 1)
        lse = m + jnp.log(jnp.sum(jnp.exp(logits - m), axis=-1,
                                  keepdims=True))                     # (TM, 1)
        dblk = diag_ref[...].astype(jnp.float32)                      # (TM, TM)
        diag = jnp.sum(jnp.where(diag_mask, dblk, 0.0), axis=-1,
                       keepdims=True)                                 # (TM, 1)
        return jnp.sum(lse - diag)                                    # scalar

    partial = (ce_partial_sum(img_row_ref, img_diag_ref)
               + ce_partial_sum(txt_row_ref, txt_diag_ref))
    # Lane-dense store of the per-tile partial; wrapper reads element [i, 0, 0].
    out_ref[...] = jnp.full(out_ref.shape, partial, dtype=out_ref.dtype)


def _pick_row_tile(n, block_rows):
    # Largest multiple of 128 that divides N and is <= block_rows; otherwise
    # fall back to the full array (always a legal block shape).
    if n % 128 != 0:
        return n
    tm = max(128, (min(block_rows, n) // 128) * 128)
    while n % tm:
        tm -= 128
    return tm


def optimized_clip_loss(logits_per_image, logits_per_text, *,
                        f1=0.8, scale=1.1, scheduled_decay=0.7, alpha=0.5,
                        block_rows=256):
    """JAX/Pallas equivalent of OptimizedCLIPLoss.forward (returns a scalar).

    Both logits matrices are taken independently, matching the PyTorch module's
    contract (the review's "text = image.T" trick would change the API).
    # TODO(synk): optional single-input fast path when logits_per_text is
    # guaranteed to be logits_per_image.T (halves HBM read traffic).
    """
    n = logits_per_image.shape[0]
    assert logits_per_image.shape == (n, n), "expected square [N, N] image logits"
    assert logits_per_text.shape == (n, n), "expected square [N, N] text logits"

    tm = _pick_row_tile(n, block_rows)
    num_tiles = n // tm

    # Double-buffered inputs (2 row slabs + 2 diag blocks) + output block,
    # plus headroom for the f32 exp temporary; capped below v7x's 64 MiB VMEM.
    step_bytes = 4 * (2 * tm * n + 2 * tm * tm) + 4 * 8 * 128
    vmem_limit = int(min(2 * step_bytes + (8 << 20), 64 << 20))

    partials = pl.pallas_call(
        _clip_ce_partial_kernel,
        out_shape=jax.ShapeDtypeStruct((num_tiles, 8, 128), jnp.float32),
        grid_spec=pltpu.PrefetchScalarGridSpec(
            num_scalar_prefetch=0,
            grid=(num_tiles,),
            in_specs=[
                pl.BlockSpec((tm, n), lambda i: (i, 0)),    # image row slab
                pl.BlockSpec((tm, n), lambda i: (i, 0)),    # text  row slab
                pl.BlockSpec((tm, tm), lambda i: (i, i)),   # image diagonal block
                pl.BlockSpec((tm, tm), lambda i: (i, i)),   # text  diagonal block
            ],
            out_specs=pl.BlockSpec((1, 8, 128), lambda i: (i, 0, 0)),
        ),
        compiler_params=pltpu.CompilerParams(
            dimension_semantics=("parallel",),
            vmem_limit_bytes=vmem_limit,
        ),
    )(logits_per_image, logits_per_text, logits_per_image, logits_per_text)

    ce_sum = jnp.sum(partials[:, 0, 0])
    base_loss = ce_sum / jnp.float32(2 * n)   # 0.5 * (mean_img_CE + mean_txt_CE)

    # Scalar penalty arithmetic lives in the wrapper (a handful of VPU ops).
    # TODO(synk): conflict_level and current_step are computed in the PyTorch
    # forward but never used in the returned loss, so they are omitted here.
    f1 = jnp.float32(f1)
    scale = jnp.float32(scale)
    scheduled_decay = jnp.float32(scheduled_decay)
    alpha = jnp.float32(alpha)
    f1_factor = (1.0 - f1) * 0.5
    adaptive_decay = scheduled_decay * (1.0 - f1_factor)
    final_decay = jnp.clip(adaptive_decay, 0.3, 0.7)   # torch.clamp(min=0.3, max=0.7)
    scale_penalty = (scale - 1.0) ** 2                 # F.mse_loss(scale, 1.0)
    metric_balance = (1.0 - f1) * alpha
    return base_loss + final_decay * scale_penalty + 0.3 * metric_balance


def _reference(logits_img, logits_txt, f1, scale, scheduled_decay, alpha):
    # Pure-JAX reference for sanity checking.
    def ce(logits):
        m = logits.shape[0]
        logp = jax.nn.log_softmax(logits, axis=-1)
        return -jnp.mean(logp[jnp.arange(m), jnp.arange(m)])
    base = 0.5 * (ce(logits_img) + ce(logits_txt))
    f1_factor = (1.0 - f1) * 0.5
    final_decay = jnp.clip(scheduled_decay * (1.0 - f1_factor), 0.3, 0.7)
    scale_penalty = (scale - 1.0) ** 2
    metric_balance = (1.0 - f1) * alpha
    return base + final_decay * scale_penalty + 0.3 * metric_balance


if __name__ == "__main__":
    key = jax.random.PRNGKey(0)
    k1, _ = jax.random.split(key)

    N = 256  # batch size -> logits are [N, N]; TM=128 exercises a 2-tile grid
    logits_per_image = jax.random.normal(k1, (N, N), dtype=jnp.float32) * 3.0
    logits_per_text = logits_per_image.T  # standard CLIP convention

    # Deterministic synthetic "model state" (stands in for model.get_dynamics()).
    f1, scale, scheduled_decay, alpha = 0.8, 1.1, 0.7, 0.5

    loss = optimized_clip_loss(
        logits_per_image, logits_per_text,
        f1=f1, scale=scale, scheduled_decay=scheduled_decay, alpha=alpha,
        block_rows=128)
    loss = jax.block_until_ready(loss)

    ref = _reference(logits_per_image, logits_per_text,
                     jnp.float32(f1), jnp.float32(scale),
                     jnp.float32(scheduled_decay), jnp.float32(alpha))
    assert jnp.allclose(loss, ref, rtol=1e-5, atol=1e-5), (loss, ref)

    print("KERNEL_OK")
</pallas_src>

<mosaic_0001>
module attributes {stable_mosaic.version = 11 : i64} {
  func.func @_clip_ce_partial_kernel(%arg0: i32, %arg1: memref<128x256xf32, #tpu.memory_space<vmem>>, %arg2: memref<128x256xf32, #tpu.memory_space<vmem>>, %arg3: memref<128x128xf32, #tpu.memory_space<vmem>>, %arg4: memref<128x128xf32, #tpu.memory_space<vmem>>, %arg5: memref<1x8x128xf32, #tpu.memory_space<vmem>>) attributes {dimension_semantics = [#tpu.dimension_semantics<parallel>], iteration_bounds = array<i64: 2>, scalar_prefetch = 0 : i64, scratch_operands = 0 : i64, tpu.core_type = #tpu.core_type<tc>, window_params = [{transform_indices = @transform_0, window_bounds = array<i64: 128, 256>}, {transform_indices = @transform_1, window_bounds = array<i64: 128, 256>}, {transform_indices = @transform_2, window_bounds = array<i64: 128, 128>}, {transform_indices = @transform_3, window_bounds = array<i64: 128, 128>}, {transform_indices = @transform_4, window_bounds = array<i64: 1, 8, 128>}]} {
    %0 = tpu.iota {dimensions = array<i32: 0>} : vector<128x128xi32>
    %1 = tpu.iota {dimensions = array<i32: 1>} : vector<128x128xi32>
    %2 = arith.cmpi eq, %0, %1 : vector<128x128xi32>
    %c0 = arith.constant 0 : index
    %c0_0 = arith.constant 0 : index
    %3 = vector.load %arg1[%c0, %c0_0] : memref<128x256xf32, #tpu.memory_space<vmem>>, vector<128x256xf32>
    %cst = arith.constant dense<0xFF800000> : vector<128xf32>
    %4 = vector.multi_reduction <maximumf>, %3, %cst [1] : vector<128x256xf32> to vector<128xf32>
    %5 = vector.shape_cast %4 : vector<128xf32> to vector<128x1xf32>
    %6 = vector.broadcast %5 : vector<128x1xf32> to vector<128x256xf32>
    %7 = arith.subf %3, %6 : vector<128x256xf32>
    %8 = math.exp %7 : vector<128x256xf32>
    %cst_1 = arith.constant dense<0.000000e+00> : vector<128xf32>
    %9 = vector.multi_reduction <add>, %8, %cst_1 [1] : vector<128x256xf32> to vector<128xf32>
    %10 = vector.shape_cast %9 : vector<128xf32> to vector<128x1xf32>
    %11 = math.log %10 : vector<128x1xf32>
    %12 = arith.addf %5, %11 : vector<128x1xf32>
    %c0_2 = arith.constant 0 : index
    %c0_3 = arith.constant 0 : index
    %13 = vector.load %arg3[%c0_2, %c0_3] : memref<128x128xf32, #tpu.memory_space<vmem>>, vector<128x128xf32>
    %cst_4 = arith.constant 0.000000e+00 : f32
    %14 = vector.broadcast %cst_4 : f32 to vector<128x128xf32>
    %15 = arith.select %2, %13, %14 : vector<128x128xi1>, vector<128x128xf32>
    %cst_5 = arith.constant dense<0.000000e+00> : vector<128xf32>
    %16 = vector.multi_reduction <add>, %15, %cst_5 [1] : vector<128x128xf32> to vector<128xf32>
    %17 = vector.shape_cast %16 : vector<128xf32> to vector<128x1xf32>
    %18 = arith.subf %12, %17 : vector<128x1xf32>
    %19 = vector.shape_cast %18 : vector<128x1xf32> to vector<1x128x1xf32>
    %cst_6 = arith.constant dense<0.000000e+00> : vector<1xf32>
    %20 = vector.multi_reduction <add>, %19, %cst_6 [1, 2] : vector<1x128x1xf32> to vector<1xf32>
    %21 = vector.shape_cast %20 : vector<1xf32> to vector<1x1x1xf32>
    %22 = vector.extract %21[0, 0, 0] : f32 from vector<1x1x1xf32>
    %c0_7 = arith.constant 0 : index
    %c0_8 = arith.constant 0 : index
    %23 = vector.load %arg2[%c0_7, %c0_8] : memref<128x256xf32, #tpu.memory_space<vmem>>, vector<128x256xf32>
    %cst_9 = arith.constant dense<0xFF800000> : vector<128xf32>
    %24 = vector.multi_reduction <maximumf>, %23, %cst_9 [1] : vector<128x256xf32> to vector<128xf32>
    %25 = vector.shape_cast %24 : vector<128xf32> to vector<128x1xf32>
    %26 = vector.broadcast %25 : vector<128x1xf32> to vector<128x256xf32>
    %27 = arith.subf %23, %26 : vector<128x256xf32>
    %28 = math.exp %27 : vector<128x256xf32>
    %cst_10 = arith.constant dense<0.000000e+00> : vector<128xf32>
    %29 = vector.multi_reduction <add>, %28, %cst_10 [1] : vector<128x256xf32> to vector<128xf32>
    %30 = vector.shape_cast %29 : vector<128xf32> to vector<128x1xf32>
    %31 = math.log %30 : vector<128x1xf32>
    %32 = arith.addf %25, %31 : vector<128x1xf32>
    %c0_11 = arith.constant 0 : index
    %c0_12 = arith.constant 0 : index
    %33 = vector.load %arg4[%c0_11, %c0_12] : memref<128x128xf32, #tpu.memory_space<vmem>>, vector<128x128xf32>
    %cst_13 = arith.constant 0.000000e+00 : f32
    %34 = vector.broadcast %cst_13 : f32 to vector<128x128xf32>
    %35 = arith.select %2, %33, %34 : vector<128x128xi1>, vector<128x128xf32>
    %cst_14 = arith.constant dense<0.000000e+00> : vector<128xf32>
    %36 = vector.multi_reduction <add>, %35, %cst_14 [1] : vector<128x128xf32> to vector<128xf32>
    %37 = vector.shape_cast %36 : vector<128xf32> to vector<128x1xf32>
    %38 = arith.subf %32, %37 : vector<128x1xf32>
    %39 = vector.shape_cast %38 : vector<128x1xf32> to vector<1x128x1xf32>
    %cst_15 = arith.constant dense<0.000000e+00> : vector<1xf32>
    %40 = vector.multi_reduction <add>, %39, %cst_15 [1, 2] : vector<1x128x1xf32> to vector<1xf32>
    %41 = vector.shape_cast %40 : vector<1xf32> to vector<1x1x1xf32>
    %42 = vector.extract %41[0, 0, 0] : f32 from vector<1x1x1xf32>
    %43 = arith.addf %22, %42 : f32
    %44 = vector.broadcast %43 : f32 to vector<1x8x128xf32>
    %c0_16 = arith.constant 0 : index
    %c0_17 = arith.constant 0 : index
    %c0_18 = arith.constant 0 : index
    %45 = vector.load %arg5[%c0_16, %c0_17, %c0_18] : memref<1x8x128xf32, #tpu.memory_space<vmem>>, vector<1x8x128xf32>
    tpu.vector_store %arg5[%c0_16, %c0_17, %c0_18], %44 {strides = array<i32>} : memref<1x8x128xf32, #tpu.memory_space<vmem>>, vector<1x8x128xf32>,
    return
  }
  func.func @transform_0(%arg0: i32) -> (i32, i32) {
    %c0_i32 = arith.constant 0 : i32
    %c0_i32_0 = arith.constant 0 : i32
    return %arg0, %c0_i32 : i32, i32
  }
  func.func @transform_1(%arg0: i32) -> (i32, i32) {
    %c0_i32 = arith.constant 0 : i32
    %c0_i32_0 = arith.constant 0 : i32
    return %arg0, %c0_i32 : i32, i32
  }
  func.func @transform_2(%arg0: i32) -> (i32, i32) {
    %c0_i32 = arith.constant 0 : i32
    return %arg0, %arg0 : i32, i32
  }
  func.func @transform_3(%arg0: i32) -> (i32, i32) {
    %c0_i32 = arith.constant 0 : i32
    return %arg0, %arg0 : i32, i32
  }
  func.func @transform_4(%arg0: i32) -> (i32, i32, i32) {
    %c0_i32 = arith.constant 0 : i32
    %c0_i32_0 = arith.constant 0 : i32
    %c0_i32_1 = arith.constant 0 : i32
    return %arg0, %c0_i32, %c0_i32_0 : i32, i32, i32
  }
}

</mosaic_0001>

<llo_original>
// kernel: tpu_custom_call.1
$region0: #{tpu_custom_call.1}
  #allocation0 [shape = 'u32[]', space=smem, size = 0x4, offset = 0x4, fixed_abs, tag = 'smem constant byte address 0x4 - core index']
  #allocation1 [shape = 'u32[144,128]{1,0:T(1,128)}', space=vmem, size = 0x12000, scoped, tag = 'internal scratch']
  %s0 = inlined_call_operand.hbm [shape: f32[256,256], index: 0, kind: input, shape index: {}]
  %s1 = inlined_call_operand.hbm [shape: f32[256,256], index: 1, kind: input, shape index: {}]
  %s2 = inlined_call_operand.hbm [shape: f32[256,256], index: 2, kind: input, shape index: {}]
  %s3 = inlined_call_operand.hbm [shape: f32[256,256], index: 3, kind: input, shape index: {}]
  %s4 = inlined_call_operand.hbm [shape: f32[2,8,128], index: 4, kind: output, shape index: {}]
  %s5 = sld [smem:[#allocation0]]
  $region65: #{tpu_custom_call.1} parent=0
    _
  %s7 = ssub.s32 1, %s5
  %s8 = scalar_select 0, %s7, %s5
  $region1: #{tpu_custom_call.1} parent=0
    #allocation2 [shape = 'u8[262144]{0}', space=vmem, size = 0x40000, scoped, tag = 'input window, operand 0']
    #allocation3 [shape = 's32[2]{0}', space=sflag, size = 0x8, scoped, tag = 'scoped memory for tpu_custom_call.1']
    #allocation4 [shape = 's32[2]{0}', space=sflag, size = 0x8, scoped, tag = 'scoped memory for tpu_custom_call.1']
    #allocation5 [shape = 'u8[262144]{0}', space=vmem, size = 0x40000, scoped, tag = 'input window, operand 1']
    #allocation6 [shape = 's32[2]{0}', space=sflag, size = 0x8, scoped, tag = 'scoped memory for tpu_custom_call.1']
    #allocation7 [shape = 'u8[131072]{0}', space=vmem, size = 0x20000, scoped, tag = 'input window, operand 2']
    #allocation8 [shape = 'u8[131072]{0}', space=vmem, size = 0x20000, scoped, tag = 'input window, operand 3']
    #allocation9 [shape = 's32[2]{0}', space=sflag, size = 0x8, scoped, tag = 'scoped memory for tpu_custom_call.1']
    #allocation10 [shape = 'u8[8192]{0}', space=vmem, size = 0x2000, scoped, tag = 'output window, operand 0']
    %9 = vsyncpa [#allocation3], 0
    %s10 = scalar_lea.sflag [#allocation3], 1
    %11 = vsyncpa %s10, 0
    %12 = vsyncpa [#allocation6], 0
    %s13 = scalar_lea.sflag [#allocation6], 1
    %14 = vsyncpa %s13, 0
    %15 = vsyncpa [#allocation9], 0
    %s16 = scalar_lea.sflag [#allocation9], 1
    %17 = vsyncpa %s16, 0
    %18 = vsyncpa [#allocation4], 0
    %s19 = scalar_lea.sflag [#allocation4], 1
    %20 = vsyncpa %s19, 0
    loop: start=0, step=1, limit=4
    $region2: #{tpu_custom_call.1} parent=1 // loop_pre_header
      _
    $region3: #{tpu_custom_call.1} parent=1 // loop_header
      %s22 = sphi 0, %s26
      %p23 = scmp.ge.s32.totalorder %s22, 4
      %s32 = sphi 0, %s34
      %s35 = sphi 0, %s32
      %s36 = sphi 0, %s35
      %s52 = sphi 0, %s36
      %s58 = sphi 0, %s60
      %s61 = sphi 0, %s58
      %s62 = sphi 0, %s61
      %s78 = sphi 0, %s62
      %s86 = sphi 0, %s88
      %s89 = sphi 0, %s86
      %s90 = sphi 0, %s89
      %s106 = sphi 0, %s90
      %s114 = sphi 0, %s116
      %s117 = sphi 0, %s114
      %s118 = sphi 0, %s117
      %s134 = sphi 0, %s118
      %s140 = sphi 0, %s142
      %s143 = sphi 0, %s140
      %s144 = sphi 0, %s143
      %s160 = sphi 0, %s144
    $region4: #{tpu_custom_call.1} parent=1 // loop_header_branch
      %25 = sbr.rel (%p23) target = $region8
    $region5: #{tpu_custom_call.1} parent=1 // loop_body
      %s27 = ssub.s32 %s22, 1
      %s28 = ssub.s32 %s22, 2
      %s29 = sadd.s32 %s22, 1
      %s30 = ssub.s32 %s22, %s29
      %p31 = scmp.eq.s32.totalorder %s30, 0
      %s33 = sadd.s32 %s32, 1
      %s34 = scalar_select %p31, %s32, %s33
      %p37 = pneg %p31
      %p38 = scmp.eq.s32.totalorder %s22, 1
      %p39 = por %p37, %p38
      %p40 = scmp.ne.s32.totalorder %s32, %s35
      %p41 = scmp.eq.s32.totalorder %s22, 0
      %p42 = por %p40, %p41
      %p43 = scmp.ne.s32.totalorder %s32, %s35
      %p44 = scmp.eq.s32.totalorder %s27, 1
      %p45 = por %p43, %p44
      %p46 = scmp.ne.s32.totalorder %s35, %s36
      %p47 = scmp.eq.s32.totalorder %s27, 0
      %p48 = por %p46, %p47
      %p49 = scmp.ne.s32.totalorder %s35, %s36
      %p50 = scmp.eq.s32.totalorder %s28, 1
      %p51 = por %p49, %p50
      %p53 = scmp.ne.s32.totalorder %s36, %s52
      %p54 = scmp.eq.s32.totalorder %s28, 0
      %p55 = por %p53, %p54
      %s56 = ssub.s32 %s22, %s29
      %p57 = scmp.eq.s32.totalorder %s56, 0
      %s59 = sadd.s32 %s58, 1
      %s60 = scalar_select %p57, %s58, %s59
      %p63 = pneg %p57
      %p64 = scmp.eq.s32.totalorder %s22, 1
      %p65 = por %p63, %p64
      %p66 = scmp.ne.s32.totalorder %s58, %s61
      %p67 = scmp.eq.s32.totalorder %s22, 0
      %p68 = por %p66, %p67
      %p69 = scmp.ne.s32.totalorder %s58, %s61
      %p70 = scmp.eq.s32.totalorder %s27, 1
      %p71 = por %p69, %p70
      %p72 = scmp.ne.s32.totalorder %s61, %s62
      %p73 = scmp.eq.s32.totalorder %s27, 0
      %p74 = por %p72, %p73
      %p75 = scmp.ne.s32.totalorder %s61, %s62
      %p76 = scmp.eq.s32.totalorder %s28, 1
      %p77 = por %p75, %p76
      %p79 = scmp.ne.s32.totalorder %s62, %s78
      %p80 = scmp.eq.s32.totalorder %s28, 0
      %p81 = por %p79, %p80
      %s82 = ssub.s32 %s22, %s29
      %s83 = ssub.s32 %s22, %s29
      %s84 = sor.u32 %s82, %s83
      %p85 = scmp.eq.s32.totalorder %s84, 0
      %s87 = sadd.s32 %s86, 1
      %s88 = scalar_select %p85, %s86, %s87
      %p91 = pneg %p85
      %p92 = scmp.eq.s32.totalorder %s22, 1
      %p93 = por %p91, %p92
      %p94 = scmp.ne.s32.totalorder %s86, %s89
      %p95 = scmp.eq.s32.totalorder %s22, 0
      %p96 = por %p94, %p95
      %p97 = scmp.ne.s32.totalorder %s86, %s89
      %p98 = scmp.eq.s32.totalorder %s27, 1
      %p99 = por %p97, %p98
      %p100 = scmp.ne.s32.totalorder %s89, %s90
      %p101 = scmp.eq.s32.totalorder %s27, 0
      %p102 = por %p100, %p101
      %p103 = scmp.ne.s32.totalorder %s89, %s90
      %p104 = scmp.eq.s32.totalorder %s28, 1
      %p105 = por %p103, %p104
      %p107 = scmp.ne.s32.totalorder %s90, %s106
      %p108 = scmp.eq.s32.totalorder %s28, 0
      %p109 = por %p107, %p108
      %s110 = ssub.s32 %s22, %s29
      %s111 = ssub.s32 %s22, %s29
      %s112 = sor.u32 %s110, %s111
      %p113 = scmp.eq.s32.totalorder %s112, 0
      %s115 = sadd.s32 %s114, 1
      %s116 = scalar_select %p113, %s114, %s115
      %p119 = pneg %p113
      %p120 = scmp.eq.s32.totalorder %s22, 1
      %p121 = por %p119, %p120
      %p122 = scmp.ne.s32.totalorder %s114, %s117
      %p123 = scmp.eq.s32.totalorder %s22, 0
      %p124 = por %p122, %p123
      %p125 = scmp.ne.s32.totalorder %s114, %s117
      %p126 = scmp.eq.s32.totalorder %s27, 1
      %p127 = por %p125, %p126
      %p128 = scmp.ne.s32.totalorder %s117, %s118
      %p129 = scmp.eq.s32.totalorder %s27, 0
      %p130 = por %p128, %p129
      %p131 = scmp.ne.s32.totalorder %s117, %s118
      %p132 = scmp.eq.s32.totalorder %s28, 1
      %p133 = por %p131, %p132
      %p135 = scmp.ne.s32.totalorder %s118, %s134
      %p136 = scmp.eq.s32.totalorder %s28, 0
      %p137 = por %p135, %p136
      %s138 = ssub.s32 %s22, %s29
      %p139 = scmp.eq.s32.totalorder %s138, 0
      %s141 = sadd.s32 %s140, 1
      %s142 = scalar_select %p139, %s140, %s141
      %p145 = pneg %p139
      %p146 = scmp.eq.s32.totalorder %s22, 1
      %p147 = por %p145, %p146
      %p148 = scmp.ne.s32.totalorder %s140, %s143
      %p149 = scmp.eq.s32.totalorder %s22, 0
      %p150 = por %p148, %p149
      %p151 = scmp.ne.s32.totalorder %s140, %s143
      %p152 = scmp.eq.s32.totalorder %s27, 1
      %p153 = por %p151, %p152
      %p154 = scmp.ne.s32.totalorder %s143, %s144
      %p155 = scmp.eq.s32.totalorder %s27, 0
      %p156 = por %p154, %p155
      %p157 = scmp.ne.s32.totalorder %s143, %s144
      %p158 = scmp.eq.s32.totalorder %s28, 1
      %p159 = por %p157, %p158
      %p161 = scmp.ne.s32.totalorder %s144, %s160
      %p162 = scmp.eq.s32.totalorder %s28, 0
      %p163 = por %p161, %p162
      %p164 = scmp.le.s32.totalorder 1, %s22
      %p165 = scmp.lt.s32.totalorder %s22, 3
      %p166 = pnand %p164, %p165
      %p167 = pneg %p166
      // Predicated region
      $region9: #{tpu_custom_call.1} parent=5 // pred_check
        _
      $region10: #{tpu_custom_call.1} parent=5 // pred_check_branch
        %169 = sbr.rel (%p166) target = $region12
      $region11: #{tpu_custom_call.1} parent=5 // pred_region
        %s170 = ssub.s32 %s22, 1
      $region12: #{tpu_custom_call.1} parent=5 // pred_fallthru
        _
      %p171 = scmp.lt.s32.totalorder %s22, 2
      // Predicated region
      $region13: #{tpu_custom_call.1} parent=5 // pred_check
        %p172 = pneg %p171
      $region14: #{tpu_custom_call.1} parent=5 // pred_check_branch
        %174 = sbr.rel (%p172) target = $region16
      $region15: #{tpu_custom_call.1} parent=5 // pred_region
        // Predicated region
        $region17: #{tpu_custom_call.1} parent=15 // pred_check
          %p175 = pneg %p42
        $region18: #{tpu_custom_call.1} parent=15 // pred_check_branch
          %177 = sbr.rel (%p175) target = $region20
        $region19: #{tpu_custom_call.1} parent=15 // pred_region
          %s178 = sand.u32 %s32, 1
          %s179 = scalar_lea.sflag [#allocation3], %s178
          %s180 = sand.u32 %s32, 1
          %s181 = smul.addr %s180, 256
          %s182 = scalar_lea.vmem [#allocation2], %s181
          %s183 = smul.u32 16, %s22
          %s185 = ssub.s32 4096, 4096
          %186 = vsyncadd %s179, %s185
          %s187 = smul.addr %s183, 2
          %s188 = smul.addr %s187, 128
          %s189 = scalar_lea.hbm %s0, %s188
          %s190 = sshll.u32 %s182, 4
          %s191 = int_to_ptr.vmem [resolvable:$true] %s190
          %196 = dma.hbm_to_vmem [thread:$0]  %s189, 4096, %s191, %s179, 256, 256, 16
        $region20: #{tpu_custom_call.1} parent=15 // pred_fallthru
          _
        // Predicated region
        $region21: #{tpu_custom_call.1} parent=15 // pred_check
          %p197 = pneg %p68
        $region22: #{tpu_custom_call.1} parent=15 // pred_check_branch
          %199 = sbr.rel (%p197) target = $region24
        $region23: #{tpu_custom_call.1} parent=15 // pred_region
          %s200 = sand.u32 %s22, 1
          %s201 = scalar_lea.sflag [#allocation6], %s200
          %s202 = sand.u32 %s58, 1
          %s203 = smul.addr %s202, 256
          %s204 = scalar_lea.vmem [#allocation5], %s203
          %s205 = smul.u32 16, %s22
          %s207 = ssub.s32 4096, 4096
          %208 = vsyncadd %s201, %s207
          %s209 = smul.addr %s205, 2
          %s210 = smul.addr %s209, 128
          %s211 = scalar_lea.hbm %s1, %s210
          %s212 = sshll.u32 %s204, 4
          %s213 = int_to_ptr.vmem [resolvable:$true] %s212
          %218 = dma.hbm_to_vmem [thread:$0]  %s211, 4096, %s213, %s201, 256, 256, 16
        $region24: #{tpu_custom_call.1} parent=15 // pred_fallthru
          _
        // Predicated region
        $region25: #{tpu_custom_call.1} parent=15 // pred_check
          %p219 = pneg %p96
        $region26: #{tpu_custom_call.1} parent=15 // pred_check_branch
          %221 = sbr.rel (%p219) target = $region28
        $region27: #{tpu_custom_call.1} parent=15 // pred_region
          %s222 = sand.u32 %s22, 1
          %s223 = scalar_lea.sflag [#allocation6], %s222
          %s224 = sand.u32 %s86, 1
          %s225 = smul.addr %s224, 128
          %s226 = scalar_lea.vmem [#allocation7], %s225
          %s227 = smul.u32 16, %s22
          %s229 = ssub.s32 2048, 2048
          %230 = vsyncadd %s223, %s229
          %s231 = smul.addr %s227, 2
          %s232 = sadd.s32 %s22, %s231
          %s233 = smul.addr %s232, 128
          %s234 = scalar_lea.hbm %s2, %s233
          %s235 = sshll.u32 %s226, 4
          %s236 = int_to_ptr.vmem [resolvable:$true] %s235
          %241 = dma.hbm_to_vmem [thread:$0]  %s234, 2048, %s236, %s223, 256, 128, 8
        $region28: #{tpu_custom_call.1} parent=15 // pred_fallthru
          _
        // Predicated region
        $region29: #{tpu_custom_call.1} parent=15 // pred_check
          %p242 = pneg %p124
        $region30: #{tpu_custom_call.1} parent=15 // pred_check_branch
          %244 = sbr.rel (%p242) target = $region32
        $region31: #{tpu_custom_call.1} parent=15 // pred_region
          %s245 = sand.u32 %s114, 1
          %s246 = scalar_lea.sflag [#allocation9], %s245
          %s247 = sand.u32 %s114, 1
          %s248 = smul.addr %s247, 128
          %s249 = scalar_lea.vmem [#allocation8], %s248
          %s250 = smul.u32 16, %s22
          %s252 = ssub.s32 2048, 2048
          %253 = vsyncadd %s246, %s252
          %s254 = smul.addr %s250, 2
          %s255 = sadd.s32 %s22, %s254
          %s256 = smul.addr %s255, 128
          %s257 = scalar_lea.hbm %s3, %s256
          %s258 = sshll.u32 %s249, 4
          %s259 = int_to_ptr.vmem [resolvable:$true] %s258
          %264 = dma.hbm_to_vmem [thread:$0]  %s257, 2048, %s259, %s246, 256, 128, 8
        $region32: #{tpu_custom_call.1} parent=15 // pred_fallthru
          _
      $region16: #{tpu_custom_call.1} parent=5 // pred_fallthru
        _
      %p265 = scmp.le.s32.totalorder 1, %s22
      %p266 = scmp.lt.s32.totalorder %s22, 3
      %p267 = pnand %p265, %p266
      %p268 = pneg %p267
      // Predicated region
      $region33: #{tpu_custom_call.1} parent=5 // pred_check
        _
      $region34: #{tpu_custom_call.1} parent=5 // pred_check_branch
        %270 = sbr.rel (%p267) target = $region36
      $region35: #{tpu_custom_call.1} parent=5 // pred_region
        %s271 = ssub.s32 %s22, 1
        %s272 = sand.u32 %s35, 1
        %s273 = scalar_lea.sflag [#allocation3], %s272
        %s274 = sand.u32 %s35, 1
        %s275 = smul.addr %s274, 256
        %s276 = scalar_lea.vmem [#allocation2], %s275
        // Predicated region
        $region37: #{tpu_custom_call.1} parent=35 // pred_check
          %p277 = pneg %p48
        $region38: #{tpu_custom_call.1} parent=35 // pred_check_branch
          %279 = sbr.rel (%p277) target = $region40
        $region39: #{tpu_custom_call.1} parent=35 // pred_region
          %280 = dma.done %s273, 4096
        $region40: #{tpu_custom_call.1} parent=35 // pred_fallthru
          _
        %s281 = sand.u32 %s27, 1
        %s282 = scalar_lea.sflag [#allocation6], %s281
        %s283 = sand.u32 %s61, 1
        %s284 = smul.addr %s283, 256
        %s285 = scalar_lea.vmem [#allocation5], %s284
        // Predicated region
        $region41: #{tpu_custom_call.1} parent=35 // pred_check
          %p286 = pneg %p74
        $region42: #{tpu_custom_call.1} parent=35 // pred_check_branch
          %288 = sbr.rel (%p286) target = $region44
        $region43: #{tpu_custom_call.1} parent=35 // pred_region
          %289 = dma.done %s282, 4096
        $region44: #{tpu_custom_call.1} parent=35 // pred_fallthru
          _
        %s290 = sand.u32 %s27, 1
        %s291 = scalar_lea.sflag [#allocation6], %s290
        %s292 = sand.u32 %s89, 1
        %s293 = smul.addr %s292, 128
        %s294 = scalar_lea.vmem [#allocation7], %s293
        // Predicated region
        $region45: #{tpu_custom_call.1} parent=35 // pred_check
          %p295 = pneg %p102
        $region46: #{tpu_custom_call.1} parent=35 // pred_check_branch
          %297 = sbr.rel (%p295) target = $region48
        $region47: #{tpu_custom_call.1} parent=35 // pred_region
          %298 = dma.done %s291, 2048
        $region48: #{tpu_custom_call.1} parent=35 // pred_fallthru
          _
        %s299 = sand.u32 %s117, 1
        %s300 = scalar_lea.sflag [#allocation9], %s299
        %s301 = sand.u32 %s117, 1
        %s302 = smul.addr %s301, 128
        %s303 = scalar_lea.vmem [#allocation8], %s302
        // Predicated region
        $region49: #{tpu_custom_call.1} parent=35 // pred_check
          %p304 = pneg %p130
        $region50: #{tpu_custom_call.1} parent=35 // pred_check_branch
          %306 = sbr.rel (%p304) target = $region52
        $region51: #{tpu_custom_call.1} parent=35 // pred_region
          %307 = dma.done %s300, 2048
        $region52: #{tpu_custom_call.1} parent=35 // pred_fallthru
          _
        %s308 = sand.u32 %s35, 1
        %s309 = scalar_lea.sflag [#allocation3], %s308
        %s310 = sand.u32 %s35, 1
        %s311 = smul.addr %s310, 256
        %s312 = scalar_lea.vmem [#allocation2], %s311
        %p313 = pneg %p48
        %p314 = pneg %p45
        %s315 = sand.u32 %s27, 1
        %s316 = scalar_lea.sflag [#allocation6], %s315
        %s317 = sand.u32 %s61, 1
        %s318 = smul.addr %s317, 256
        %s319 = scalar_lea.vmem [#allocation5], %s318
        %p320 = pneg %p74
        %p321 = pneg %p71
        %s322 = sand.u32 %s27, 1
        %s323 = scalar_lea.sflag [#allocation6], %s322
        %s324 = sand.u32 %s89, 1
        %s325 = smul.addr %s324, 128
        %s326 = scalar_lea.vmem [#allocation7], %s325
        %p327 = pneg %p102
        %p328 = pneg %p99
        %s329 = sand.u32 %s117, 1
        %s330 = scalar_lea.sflag [#allocation9], %s329
        %s331 = sand.u32 %s117, 1
        %s332 = smul.addr %s331, 128
        %s333 = scalar_lea.vmem [#allocation8], %s332
        %p334 = pneg %p130
        %p335 = pneg %p127
        %p336 = pneg %p156
        %p337 = pneg %p153
        %s338 = sand.u32 %s143, 1
        %s339 = scalar_lea.sflag [#allocation4], %s338
        %s340 = sand.u32 %s143, 1
        %s341 = smul.addr %s340, 8
        %s342 = scalar_lea.vmem [#allocation10], %s341
        %s343 = smul.u32 16, %s27
        %s344 = smul.u32 16, %s27
        %s345 = smul.u32 16, %s27
        %s346 = smul.u32 16, %s27
        %v347 = vlaneseq
        %v348 = vshrl.u32 %v347, 7
        %v349 = vadd.s32 %v348, 8
        %v350 = vadd.s32 %v348, 16
        %v351 = vadd.s32 %v348, 24
        %v352 = vadd.s32 %v348, 32
        %v353 = vadd.s32 %v348, 40
        %v354 = vadd.s32 %v348, 48
        %v355 = vadd.s32 %v348, 56
        %v356 = vadd.s32 %v348, 64
        %v357 = vadd.s32 %v348, 72
        %v358 = vadd.s32 %v348, 80
        %v359 = vadd.s32 %v348, 88
        %v360 = vadd.s32 %v348, 96
        %v361 = vadd.s32 %v348, 104
        %v362 = vadd.s32 %v348, 112
        %v363 = vadd.s32 %v348, 120
        %v364 = vlaneseq
        %v365 = vand.u32 %v364, 127
        %vm366 = vcmp.eq.s32.totalorder %v348, %v365
        %vm367 = vcmp.eq.s32.totalorder %v349, %v365
        %vm368 = vcmp.eq.s32.totalorder %v350, %v365
        %vm369 = vcmp.eq.s32.totalorder %v351, %v365
        %vm370 = vcmp.eq.s32.totalorder %v352, %v365
        %vm371 = vcmp.eq.s32.totalorder %v353, %v365
        %vm372 = vcmp.eq.s32.totalorder %v354, %v365
        %vm373 = vcmp.eq.s32.totalorder %v355, %v365
        %vm374 = vcmp.eq.s32.totalorder %v356, %v365
        %vm375 = vcmp.eq.s32.totalorder %v357, %v365
        %vm376 = vcmp.eq.s32.totalorder %v358, %v365
        %vm377 = vcmp.eq.s32.totalorder %v359, %v365
        %vm378 = vcmp.eq.s32.totalorder %v360, %v365
        %vm379 = vcmp.eq.s32.totalorder %v361, %v365
        %vm380 = vcmp.eq.s32.totalorder %v362, %v365
        %vm381 = vcmp.eq.s32.totalorder %v363, %v365
        %v382 = vld [vmem:[%s276] sm:$0xff]
        %v383 = vld [vmem:[%s276 + $0x8] sm:$0xff]
        %v384 = vld [vmem:[%s276 + $0x10] sm:$0xff]
        %v385 = vld [vmem:[%s276 + $0x18] sm:$0xff]
        %v386 = vld [vmem:[%s276 + $0x20] sm:$0xff]
        %v387 = vld [vmem:[%s276 + $0x28] sm:$0xff]
        %v388 = vld [vmem:[%s276 + $0x30] sm:$0xff]
        %v389 = vld [vmem:[%s276 + $0x38] sm:$0xff]
        %v390 = vld [vmem:[%s276 + $0x40] sm:$0xff]
        %v391 = vld [vmem:[%s276 + $0x48] sm:$0xff]
        %v392 = vld [vmem:[%s276 + $0x50] sm:$0xff]
        %v393 = vld [vmem:[%s276 + $0x58] sm:$0xff]
        %v394 = vld [vmem:[%s276 + $0x60] sm:$0xff]
        %v395 = vld [vmem:[%s276 + $0x68] sm:$0xff]
        %v396 = vld [vmem:[%s276 + $0x70] sm:$0xff]
        %v397 = vld [vmem:[%s276 + $0x78] sm:$0xff]
        %v398 = vld [vmem:[%s276 + $0x80] sm:$0xff]
        %v399 = vld [vmem:[%s276 + $0x88] sm:$0xff]
        %v400 = vld [vmem:[%s276 + $0x90] sm:$0xff]
        %v401 = vld [vmem:[%s276 + $0x98] sm:$0xff]
        %v402 = vld [vmem:[%s276 + $0xa0] sm:$0xff]
        %v403 = vld [vmem:[%s276 + $0xa8] sm:$0xff]
        %v404 = vld [vmem:[%s276 + $0xb0] sm:$0xff]
        %v405 = vld [vmem:[%s276 + $0xb8] sm:$0xff]
        %v406 = vld [vmem:[%s276 + $0xc0] sm:$0xff]
        %v407 = vld [vmem:[%s276 + $0xc8] sm:$0xff]
        %v408 = vld [vmem:[%s276 + $0xd0] sm:$0xff]
        %v409 = vld [vmem:[%s276 + $0xd8] sm:$0xff]
        %v410 = vld [vmem:[%s276 + $0xe0] sm:$0xff]
        %v411 = vld [vmem:[%s276 + $0xe8] sm:$0xff]
        %v412 = vld [vmem:[%s276 + $0xf0] sm:$0xff]
        %v413 = vld [vmem:[%s276 + $0xf8] sm:$0xff]
        %v414 = vmax.f32 %v382, %v383
        %415 = vmax.xlane.f32.xlu0 %v414
        %v416 = vpop.xlane.xlu0 %415
        %v417 = vmax.f32 %v384, %v385
        %418 = vmax.xlane.f32.xlu0 %v417
        %v419 = vpop.xlane.xlu0 %418
        %v420 = vmax.f32 %v386, %v387
        %421 = vmax.xlane.f32.xlu0 %v420
        %v422 = vpop.xlane.xlu0 %421
        %v423 = vmax.f32 %v388, %v389
        %424 = vmax.xlane.f32.xlu0 %v423
        %v425 = vpop.xlane.xlu0 %424
        %v426 = vmax.f32 %v390, %v391
        %427 = vmax.xlane.f32.xlu0 %v426
        %v428 = vpop.xlane.xlu0 %427
        %v429 = vmax.f32 %v392, %v393
        %430 = vmax.xlane.f32.xlu0 %v429
        %v431 = vpop.xlane.xlu0 %430
        %v432 = vmax.f32 %v394, %v395
        %433 = vmax.xlane.f32.xlu0 %v432
        %v434 = vpop.xlane.xlu0 %433
        %v435 = vmax.f32 %v396, %v397
        %436 = vmax.xlane.f32.xlu0 %v435
        %v437 = vpop.xlane.xlu0 %436
        %v438 = vmax.f32 %v398, %v399
        %439 = vmax.xlane.f32.xlu0 %v438
        %v440 = vpop.xlane.xlu0 %439
        %v441 = vmax.f32 %v400, %v401
        %442 = vmax.xlane.f32.xlu0 %v441
        %v443 = vpop.xlane.xlu0 %442
        %v444 = vmax.f32 %v402, %v403
        %445 = vmax.xlane.f32.xlu0 %v444
        %v446 = vpop.xlane.xlu0 %445
        %v447 = vmax.f32 %v404, %v405
        %448 = vmax.xlane.f32.xlu0 %v447
        %v449 = vpop.xlane.xlu0 %448
        %v450 = vmax.f32 %v406, %v407
        %451 = vmax.xlane.f32.xlu0 %v450
        %v452 = vpop.xlane.xlu0 %451
        %v453 = vmax.f32 %v408, %v409
        %454 = vmax.xlane.f32.xlu0 %v453
        %v455 = vpop.xlane.xlu0 %454
        %v456 = vmax.f32 %v410, %v411
        %457 = vmax.xlane.f32.xlu0 %v456
        %v458 = vpop.xlane.xlu0 %457
        %v459 = vmax.f32 %v412, %v413
        %460 = vmax.xlane.f32.xlu0 %v459
        %v461 = vpop.xlane.xlu0 %460
        %v462 = vsub.f32 %v382, %v416
        %v463 = vsub.f32 %v383, %v416
        %v464 = vsub.f32 %v384, %v419
        %v465 = vsub.f32 %v385, %v419
        %v466 = vsub.f32 %v386, %v422
        %v467 = vsub.f32 %v387, %v422
        %v468 = vsub.f32 %v388, %v425
        %v469 = vsub.f32 %v389, %v425
        %v470 = vsub.f32 %v390, %v428
        %v471 = vsub.f32 %v391, %v428
        %v472 = vsub.f32 %v392, %v431
        %v473 = vsub.f32 %v393, %v431
        %v474 = vsub.f32 %v394, %v434
        %v475 = vsub.f32 %v395, %v434
        %v476 = vsub.f32 %v396, %v437
        %v477 = vsub.f32 %v397, %v437
        %v478 = vsub.f32 %v398, %v440
        %v479 = vsub.f32 %v399, %v440
        %v480 = vsub.f32 %v400, %v443
        %v481 = vsub.f32 %v401, %v443
        %v482 = vsub.f32 %v402, %v446
        %v483 = vsub.f32 %v403, %v446
        %v484 = vsub.f32 %v404, %v449
        %v485 = vsub.f32 %v405, %v449
        %v486 = vsub.f32 %v406, %v452
        %v487 = vsub.f32 %v407, %v452
        %v488 = vsub.f32 %v408, %v455
        %v489 = vsub.f32 %v409, %v455
        %v490 = vsub.f32 %v410, %v458
        %v491 = vsub.f32 %v411, %v458
        %v492 = vsub.f32 %v412, %v461
        %v493 = vsub.f32 %v413, %v461
        %v494 = vmul.f32 %v462, 1.442695
        %v495 = vpow.pop %v494
        %v496 = vmul.f32 %v463, 1.442695
        %v497 = vpow.pop %v496
        %v498 = vmul.f32 %v464, 1.442695
        %v499 = vpow.pop %v498
        %v500 = vmul.f32 %v465, 1.442695
        %v501 = vpow.pop %v500
        %v502 = vmul.f32 %v466, 1.442695
        %v503 = vpow.pop %v502
        %v504 = vmul.f32 %v467, 1.442695
        %v505 = vpow.pop %v504
        %v506 = vmul.f32 %v468, 1.442695
        %v507 = vpow.pop %v506
        %v508 = vmul.f32 %v469, 1.442695
        %v509 = vpow.pop %v508
        %v510 = vmul.f32 %v470, 1.442695
        %v511 = vpow.pop %v510
        %v512 = vmul.f32 %v471, 1.442695
        %v513 = vpow.pop %v512
        %v514 = vmul.f32 %v472, 1.442695
        %v515 = vpow.pop %v514
        %v516 = vmul.f32 %v473, 1.442695
        %v517 = vpow.pop %v516
        %v518 = vmul.f32 %v474, 1.442695
        %v519 = vpow.pop %v518
        %v520 = vmul.f32 %v475, 1.442695
        %v521 = vpow.pop %v520
        %v522 = vmul.f32 %v476, 1.442695
        %v523 = vpow.pop %v522
        %v524 = vmul.f32 %v477, 1.442695
        %v525 = vpow.pop %v524
        %v526 = vmul.f32 %v478, 1.442695
        %v527 = vpow.pop %v526
        %v528 = vmul.f32 %v479, 1.442695
        %v529 = vpow.pop %v528
        %v530 = vmul.f32 %v480, 1.442695
        %v531 = vpow.pop %v530
        %v532 = vmul.f32 %v481, 1.442695
        %v533 = vpow.pop %v532
        %v534 = vmul.f32 %v482, 1.442695
        %v535 = vpow.pop %v534
        %v536 = vmul.f32 %v483, 1.442695
        %v537 = vpow.pop %v536
        %v538 = vmul.f32 %v484, 1.442695
        %v539 = vpow.pop %v538
        %v540 = vmul.f32 %v485, 1.442695
        %v541 = vpow.pop %v540
        %v542 = vmul.f32 %v486, 1.442695
        %v543 = vpow.pop %v542
        %v544 = vmul.f32 %v487, 1.442695
        %v545 = vpow.pop %v544
        %v546 = vmul.f32 %v488, 1.442695
        %v547 = vpow.pop %v546
        %v548 = vmul.f32 %v489, 1.442695
        %v549 = vpow.pop %v548
        %v550 = vmul.f32 %v490, 1.442695
        %v551 = vpow.pop %v550
        %v552 = vmul.f32 %v491, 1.442695
        %v553 = vpow.pop %v552
        %v554 = vmul.f32 %v492, 1.442695
        %v555 = vpow.pop %v554
        %v556 = vmul.f32 %v493, 1.442695
        %v557 = vpow.pop %v556
        %v558 = vadd.f32 %v495, %v497
        %559 = vadd.xlane.f32.xlu0 %v558
        %v560 = vpop.xlane.xlu0 %559
        %v561 = vadd.f32 %v499, %v501
        %562 = vadd.xlane.f32.xlu0 %v561
        %v563 = vpop.xlane.xlu0 %562
        %v564 = vadd.f32 %v503, %v505
        %565 = vadd.xlane.f32.xlu0 %v564
        %v566 = vpop.xlane.xlu0 %565
        %v567 = vadd.f32 %v507, %v509
        %568 = vadd.xlane.f32.xlu0 %v567
        %v569 = vpop.xlane.xlu0 %568
        %v570 = vadd.f32 %v511, %v513
        %571 = vadd.xlane.f32.xlu0 %v570
        %v572 = vpop.xlane.xlu0 %571
        %v573 = vadd.f32 %v515, %v517
        %574 = vadd.xlane.f32.xlu0 %v573
        %v575 = vpop.xlane.xlu0 %574
        %v576 = vadd.f32 %v519, %v521
        %577 = vadd.xlane.f32.xlu0 %v576
        %v578 = vpop.xlane.xlu0 %577
        %v579 = vadd.f32 %v523, %v525
        %580 = vadd.xlane.f32.xlu0 %v579
        %v581 = vpop.xlane.xlu0 %580
        %v582 = vadd.f32 %v527, %v529
        %583 = vadd.xlane.f32.xlu0 %v582
        %v584 = vpop.xlane.xlu0 %583
        %v585 = vadd.f32 %v531, %v533
        %586 = vadd.xlane.f32.xlu0 %v585
        %v587 = vpop.xlane.xlu0 %586
        %v588 = vadd.f32 %v535, %v537
        %589 = vadd.xlane.f32.xlu0 %v588
        %v590 = vpop.xlane.xlu0 %589
        %v591 = vadd.f32 %v539, %v541
        %592 = vadd.xlane.f32.xlu0 %v591
        %v593 = vpop.xlane.xlu0 %592
        %v594 = vadd.f32 %v543, %v545
        %595 = vadd.xlane.f32.xlu0 %v594
        %v596 = vpop.xlane.xlu0 %595
        %v597 = vadd.f32 %v547, %v549
        %598 = vadd.xlane.f32.xlu0 %v597
        %v599 = vpop.xlane.xlu0 %598
        %v600 = vadd.f32 %v551, %v553
        %601 = vadd.xlane.f32.xlu0 %v600
        %v602 = vpop.xlane.xlu0 %601
        %v603 = vadd.f32 %v555, %v557
        %604 = vadd.xlane.f32.xlu0 %v603
        %v605 = vpop.xlane.xlu0 %604
        %v606 = vlog2.pop %v560
        %v607 = vmul.f32 %v606, 0.6931472
        %v608 = vlog2.pop %v563
        %v609 = vmul.f32 %v608, 0.6931472
        %v610 = vlog2.pop %v566
        %v611 = vmul.f32 %v610, 0.6931472
        %v612 = vlog2.pop %v569
        %v613 = vmul.f32 %v612, 0.6931472
        %v614 = vlog2.pop %v572
        %v615 = vmul.f32 %v614, 0.6931472
        %v616 = vlog2.pop %v575
        %v617 = vmul.f32 %v616, 0.6931472
        %v618 = vlog2.pop %v578
        %v619 = vmul.f32 %v618, 0.6931472
        %v620 = vlog2.pop %v581
        %v621 = vmul.f32 %v620, 0.6931472
        %v622 = vlog2.pop %v584
        %v623 = vmul.f32 %v622, 0.6931472
        %v624 = vlog2.pop %v587
        %v625 = vmul.f32 %v624, 0.6931472
        %v626 = vlog2.pop %v590
        %v627 = vmul.f32 %v626, 0.6931472
        %v628 = vlog2.pop %v593
        %v629 = vmul.f32 %v628, 0.6931472
        %v630 = vlog2.pop %v596
        %v631 = vmul.f32 %v630, 0.6931472
        %v632 = vlog2.pop %v599
        %v633 = vmul.f32 %v632, 0.6931472
        %v634 = vlog2.pop %v602
        %v635 = vmul.f32 %v634, 0.6931472
        %v636 = vlog2.pop %v605
        %v637 = vmul.f32 %v636, 0.6931472
        %v638 = vadd.f32 %v416, %v607
        %v639 = vadd.f32 %v419, %v609
        %v640 = vadd.f32 %v422, %v611
        %v641 = vadd.f32 %v425, %v613
        %v642 = vadd.f32 %v428, %v615
        %v643 = vadd.f32 %v431, %v617
        %v644 = vadd.f32 %v434, %v619
        %v645 = vadd.f32 %v437, %v621
        %v646 = vadd.f32 %v440, %v623
        %v647 = vadd.f32 %v443, %v625
        %v648 = vadd.f32 %v446, %v627
        %v649 = vadd.f32 %v449, %v629
        %v650 = vadd.f32 %v452, %v631
        %v651 = vadd.f32 %v455, %v633
        %v652 = vadd.f32 %v458, %v635
        %v653 = vadd.f32 %v461, %v637
        %v654 = vld [vmem:[%s294] sm:$0xff]
        %v655 = vld [vmem:[%s294 + $0x8] sm:$0xff]
        %v656 = vld [vmem:[%s294 + $0x10] sm:$0xff]
        %v657 = vld [vmem:[%s294 + $0x18] sm:$0xff]
        %v658 = vld [vmem:[%s294 + $0x20] sm:$0xff]
        %v659 = vld [vmem:[%s294 + $0x28] sm:$0xff]
        %v660 = vld [vmem:[%s294 + $0x30] sm:$0xff]
        %v661 = vld [vmem:[%s294 + $0x38] sm:$0xff]
        %v662 = vld [vmem:[%s294 + $0x40] sm:$0xff]
        %v663 = vld [vmem:[%s294 + $0x48] sm:$0xff]
        %v664 = vld [vmem:[%s294 + $0x50] sm:$0xff]
        %v665 = vld [vmem:[%s294 + $0x58] sm:$0xff]
        %v666 = vld [vmem:[%s294 + $0x60] sm:$0xff]
        %v667 = vld [vmem:[%s294 + $0x68] sm:$0xff]
        %v668 = vld [vmem:[%s294 + $0x70] sm:$0xff]
        %v669 = vld [vmem:[%s294 + $0x78] sm:$0xff]
        %v670 = vsel %vm366, %v654, 0.0
        %v671 = vsel %vm367, %v655, 0.0
        %v672 = vsel %vm368, %v656, 0.0
        %v673 = vsel %vm369, %v657, 0.0
        %v674 = vsel %vm370, %v658, 0.0
        %v675 = vsel %vm371, %v659, 0.0
        %v676 = vsel %vm372, %v660, 0.0
        %v677 = vsel %vm373, %v661, 0.0
        %v678 = vsel %vm374, %v662, 0.0
        %v679 = vsel %vm375, %v663, 0.0
        %v680 = vsel %vm376, %v664, 0.0
        %v681 = vsel %vm377, %v665, 0.0
        %v682 = vsel %vm378, %v666, 0.0
        %v683 = vsel %vm379, %v667, 0.0
        %v684 = vsel %vm380, %v668, 0.0
        %v685 = vsel %vm381, %v669, 0.0
        %686 = vadd.xlane.f32.xlu0 %v670
        %v687 = vpop.xlane.xlu0 %686
        %688 = vadd.xlane.f32.xlu0 %v671
        %v689 = vpop.xlane.xlu0 %688
        %690 = vadd.xlane.f32.xlu0 %v672
        %v691 = vpop.xlane.xlu0 %690
        %692 = vadd.xlane.f32.xlu0 %v673
        %v693 = vpop.xlane.xlu0 %692
        %694 = vadd.xlane.f32.xlu0 %v674
        %v695 = vpop.xlane.xlu0 %694
        %696 = vadd.xlane.f32.xlu0 %v675
        %v697 = vpop.xlane.xlu0 %696
        %698 = vadd.xlane.f32.xlu0 %v676
        %v699 = vpop.xlane.xlu0 %698
        %700 = vadd.xlane.f32.xlu0 %v677
        %v701 = vpop.xlane.xlu0 %700
        %702 = vadd.xlane.f32.xlu0 %v678
        %v703 = vpop.xlane.xlu0 %702
        %704 = vadd.xlane.f32.xlu0 %v679
        %v705 = vpop.xlane.xlu0 %704
        %706 = vadd.xlane.f32.xlu0 %v680
        %v707 = vpop.xlane.xlu0 %706
        %708 = vadd.xlane.f32.xlu0 %v681
        %v709 = vpop.xlane.xlu0 %708
        %710 = vadd.xlane.f32.xlu0 %v682
        %v711 = vpop.xlane.xlu0 %710
        %712 = vadd.xlane.f32.xlu0 %v683
        %v713 = vpop.xlane.xlu0 %712
        %714 = vadd.xlane.f32.xlu0 %v684
        %v715 = vpop.xlane.xlu0 %714
        %716 = vadd.xlane.f32.xlu0 %v685
        %v717 = vpop.xlane.xlu0 %716
        %v718 = vsub.f32 %v638, %v687
        %v719 = vsub.f32 %v639, %v689
        %v720 = vsub.f32 %v640, %v691
        %v721 = vsub.f32 %v641, %v693
        %v722 = vsub.f32 %v642, %v695
        %v723 = vsub.f32 %v643, %v697
        %v724 = vsub.f32 %v644, %v699
        %v725 = vsub.f32 %v645, %v701
        %v726 = vsub.f32 %v646, %v703
        %v727 = vsub.f32 %v647, %v705
        %v728 = vsub.f32 %v648, %v707
        %v729 = vsub.f32 %v649, %v709
        %v730 = vsub.f32 %v650, %v711
        %v731 = vsub.f32 %v651, %v713
        %v732 = vsub.f32 %v652, %v715
        %v733 = vsub.f32 %v653, %v717
        %vm734 = vcmask 7168
        %v735 = vsel %vm734, %v718, 0.0
        %v736 = vsel %vm734, %v719, 0.0
        %v737 = vadd.f32 %v735, %v736
        %v738 = vsel %vm734, %v720, 0.0
        %v739 = vadd.f32 %v737, %v738
        %v740 = vsel %vm734, %v721, 0.0
        %v741 = vadd.f32 %v739, %v740
        %v742 = vsel %vm734, %v722, 0.0
        %v743 = vadd.f32 %v741, %v742
        %v744 = vsel %vm734, %v723, 0.0
        %v745 = vadd.f32 %v743, %v744
        %v746 = vsel %vm734, %v724, 0.0
        %v747 = vadd.f32 %v745, %v746
        %v748 = vsel %vm734, %v725, 0.0
        %v749 = vadd.f32 %v747, %v748
        %v750 = vsel %vm734, %v726, 0.0
        %v751 = vadd.f32 %v749, %v750
        %v752 = vsel %vm734, %v727, 0.0
        %v753 = vadd.f32 %v751, %v752
        %v754 = vsel %vm734, %v728, 0.0
        %v755 = vadd.f32 %v753, %v754
        %v756 = vsel %vm734, %v729, 0.0
        %v757 = vadd.f32 %v755, %v756
        %v758 = vsel %vm734, %v730, 0.0
        %v759 = vadd.f32 %v757, %v758
        %v760 = vsel %vm734, %v731, 0.0
        %v761 = vadd.f32 %v759, %v760
        %v762 = vsel %vm734, %v732, 0.0
        %v763 = vadd.f32 %v761, %v762
        %v764 = vsel %vm734, %v733, 0.0
        %v765 = vadd.f32 %v763, %v764
        %766 = vadd.xlane.f32.xlu0 %v765
        %v767 = vpop.xlane.xlu0 %766
        %v768 = vrot.slane %v767, 4
        %v769 = vadd.f32 %v767, %v768
        %v770 = vrot.slane %v769, 2
        %v771 = vadd.f32 %v769, %v770
        %v772 = vrot.slane %v771, 1
        %v773 = vadd.f32 %v771, %v772
        %s774 = vtos %v773
        %v775 = vld [vmem:[%s285] sm:$0xff]
        %v776 = vld [vmem:[%s285 + $0x8] sm:$0xff]
        %v777 = vld [vmem:[%s285 + $0x10] sm:$0xff]
        %v778 = vld [vmem:[%s285 + $0x18] sm:$0xff]
        %v779 = vld [vmem:[%s285 + $0x20] sm:$0xff]
        %v780 = vld [vmem:[%s285 + $0x28] sm:$0xff]
        %v781 = vld [vmem:[%s285 + $0x30] sm:$0xff]
        %v782 = vld [vmem:[%s285 + $0x38] sm:$0xff]
        %v783 = vld [vmem:[%s285 + $0x40] sm:$0xff]
        %v784 = vld [vmem:[%s285 + $0x48] sm:$0xff]
        %v785 = vld [vmem:[%s285 + $0x50] sm:$0xff]
        %v786 = vld [vmem:[%s285 + $0x58] sm:$0xff]
        %v787 = vld [vmem:[%s285 + $0x60] sm:$0xff]
        %v788 = vld [vmem:[%s285 + $0x68] sm:$0xff]
        %v789 = vld [vmem:[%s285 + $0x70] sm:$0xff]
        %v790 = vld [vmem:[%s285 + $0x78] sm:$0xff]
        %v791 = vld [vmem:[%s285 + $0x80] sm:$0xff]
        %v792 = vld [vmem:[%s285 + $0x88] sm:$0xff]
        %v793 = vld [vmem:[%s285 + $0x90] sm:$0xff]
        %v794 = vld [vmem:[%s285 + $0x98] sm:$0xff]
        %v795 = vld [vmem:[%s285 + $0xa0] sm:$0xff]
        %v796 = vld [vmem:[%s285 + $0xa8] sm:$0xff]
        %v797 = vld [vmem:[%s285 + $0xb0] sm:$0xff]
        %v798 = vld [vmem:[%s285 + $0xb8] sm:$0xff]
        %v799 = vld [vmem:[%s285 + $0xc0] sm:$0xff]
        %v800 = vld [vmem:[%s285 + $0xc8] sm:$0xff]
        %v801 = vld [vmem:[%s285 + $0xd0] sm:$0xff]
        %v802 = vld [vmem:[%s285 + $0xd8] sm:$0xff]
        %v803 = vld [vmem:[%s285 + $0xe0] sm:$0xff]
        %v804 = vld [vmem:[%s285 + $0xe8] sm:$0xff]
        %v805 = vld [vmem:[%s285 + $0xf0] sm:$0xff]
        %v806 = vld [vmem:[%s285 + $0xf8] sm:$0xff]
        %v807 = vmax.f32 %v775, %v776
        %808 = vmax.xlane.f32.xlu0 %v807
        %v809 = vpop.xlane.xlu0 %808
        %v810 = vmax.f32 %v777, %v778
        %811 = vmax.xlane.f32.xlu0 %v810
        %v812 = vpop.xlane.xlu0 %811
        %v813 = vmax.f32 %v779, %v780
        %814 = vmax.xlane.f32.xlu0 %v813
        %v815 = vpop.xlane.xlu0 %814
        %v816 = vmax.f32 %v781, %v782
        %817 = vmax.xlane.f32.xlu0 %v816
        %v818 = vpop.xlane.xlu0 %817
        %v819 = vmax.f32 %v783, %v784
        %820 = vmax.xlane.f32.xlu0 %v819
        %v821 = vpop.xlane.xlu0 %820
        %v822 = vmax.f32 %v785, %v786
        %823 = vmax.xlane.f32.xlu0 %v822
        %v824 = vpop.xlane.xlu0 %823
        %v825 = vmax.f32 %v787, %v788
        %826 = vmax.xlane.f32.xlu0 %v825
        %v827 = vpop.xlane.xlu0 %826
        %v828 = vmax.f32 %v789, %v790
        %829 = vmax.xlane.f32.xlu0 %v828
        %v830 = vpop.xlane.xlu0 %829
        %v831 = vmax.f32 %v791, %v792
        %832 = vmax.xlane.f32.xlu0 %v831
        %v833 = vpop.xlane.xlu0 %832
        %v834 = vmax.f32 %v793, %v794
        %835 = vmax.xlane.f32.xlu0 %v834
        %v836 = vpop.xlane.xlu0 %835
        %v837 = vmax.f32 %v795, %v796
        %838 = vmax.xlane.f32.xlu0 %v837
        %v839 = vpop.xlane.xlu0 %838
        %v840 = vmax.f32 %v797, %v798
        %841 = vmax.xlane.f32.xlu0 %v840
        %v842 = vpop.xlane.xlu0 %841
        %v843 = vmax.f32 %v799, %v800
        %844 = vmax.xlane.f32.xlu0 %v843
        %v845 = vpop.xlane.xlu0 %844
        %v846 = vmax.f32 %v801, %v802
        %847 = vmax.xlane.f32.xlu0 %v846
        %v848 = vpop.xlane.xlu0 %847
        %v849 = vmax.f32 %v803, %v804
        %850 = vmax.xlane.f32.xlu0 %v849
        %v851 = vpop.xlane.xlu0 %850
        %v852 = vmax.f32 %v805, %v806
        %853 = vmax.xlane.f32.xlu0 %v852
        %v854 = vpop.xlane.xlu0 %853
        %v855 = vsub.f32 %v775, %v809
        %v856 = vsub.f32 %v776, %v809
        %v857 = vsub.f32 %v777, %v812
        %v858 = vsub.f32 %v778, %v812
        %v859 = vsub.f32 %v779, %v815
        %v860 = vsub.f32 %v780, %v815
        %v861 = vsub.f32 %v781, %v818
        %v862 = vsub.f32 %v782, %v818
        %v863 = vsub.f32 %v783, %v821
        %v864 = vsub.f32 %v784, %v821
        %v865 = vsub.f32 %v785, %v824
        %v866 = vsub.f32 %v786, %v824
        %v867 = vsub.f32 %v787, %v827
        %v868 = vsub.f32 %v788, %v827
        %v869 = vsub.f32 %v789, %v830
        %v870 = vsub.f32 %v790, %v830
        %v871 = vsub.f32 %v791, %v833
        %v872 = vsub.f32 %v792, %v833
        %v873 = vsub.f32 %v793, %v836
        %v874 = vsub.f32 %v794, %v836
        %v875 = vsub.f32 %v795, %v839
        %v876 = vsub.f32 %v796, %v839
        %v877 = vsub.f32 %v797, %v842
        %v878 = vsub.f32 %v798, %v842
        %v879 = vsub.f32 %v799, %v845
        %v880 = vsub.f32 %v800, %v845
        %v881 = vsub.f32 %v801, %v848
        %v882 = vsub.f32 %v802, %v848
        %v883 = vsub.f32 %v803, %v851
        %v884 = vsub.f32 %v804, %v851
        %v885 = vsub.f32 %v805, %v854
        %v886 = vsub.f32 %v806, %v854
        %v887 = vmul.f32 %v855, 1.442695
        %v888 = vpow.pop %v887
        %v889 = vmul.f32 %v856, 1.442695
        %v890 = vpow.pop %v889
        %v891 = vmul.f32 %v857, 1.442695
        %v892 = vpow.pop %v891
        %v893 = vmul.f32 %v858, 1.442695
        %v894 = vpow.pop %v893
        %v895 = vmul.f32 %v859, 1.442695
        %v896 = vpow.pop %v895
        %v897 = vmul.f32 %v860, 1.442695
        %v898 = vpow.pop %v897
        %v899 = vmul.f32 %v861, 1.442695
        %v900 = vpow.pop %v899
        %v901 = vmul.f32 %v862, 1.442695
        %v902 = vpow.pop %v901
        %v903 = vmul.f32 %v863, 1.442695
        %v904 = vpow.pop %v903
        %v905 = vmul.f32 %v864, 1.442695
        %v906 = vpow.pop %v905
        %v907 = vmul.f32 %v865, 1.442695
        %v908 = vpow.pop %v907
        %v909 = vmul.f32 %v866, 1.442695
        %v910 = vpow.pop %v909
        %v911 = vmul.f32 %v867, 1.442695
        %v912 = vpow.pop %v911
        %v913 = vmul.f32 %v868, 1.442695
        %v914 = vpow.pop %v913
        %v915 = vmul.f32 %v869, 1.442695
        %v916 = vpow.pop %v915
        %v917 = vmul.f32 %v870, 1.442695
        %v918 = vpow.pop %v917
        %v919 = vmul.f32 %v871, 1.442695
        %v920 = vpow.pop %v919
        %v921 = vmul.f32 %v872, 1.442695
        %v922 = vpow.pop %v921
        %v923 = vmul.f32 %v873, 1.442695
        %v924 = vpow.pop %v923
        %v925 = vmul.f32 %v874, 1.442695
        %v926 = vpow.pop %v925
        %v927 = vmul.f32 %v875, 1.442695
        %v928 = vpow.pop %v927
        %v929 = vmul.f32 %v876, 1.442695
        %v930 = vpow.pop %v929
        %v931 = vmul.f32 %v877, 1.442695
        %v932 = vpow.pop %v931
        %v933 = vmul.f32 %v878, 1.442695
        %v934 = vpow.pop %v933
        %v935 = vmul.f32 %v879, 1.442695
        %v936 = vpow.pop %v935
        %v937 = vmul.f32 %v880, 1.442695
        %v938 = vpow.pop %v937
        %v939 = vmul.f32 %v881, 1.442695
        %v940 = vpow.pop %v939
        %v941 = vmul.f32 %v882, 1.442695
        %v942 = vpow.pop %v941
        %v943 = vmul.f32 %v883, 1.442695
        %v944 = vpow.pop %v943
        %v945 = vmul.f32 %v884, 1.442695
        %v946 = vpow.pop %v945
        %v947 = vmul.f32 %v885, 1.442695
        %v948 = vpow.pop %v947
        %v949 = vmul.f32 %v886, 1.442695
        %v950 = vpow.pop %v949
        %v951 = vadd.f32 %v888, %v890
        %952 = vadd.xlane.f32.xlu0 %v951
        %v953 = vpop.xlane.xlu0 %952
        %v954 = vadd.f32 %v892, %v894
        %955 = vadd.xlane.f32.xlu0 %v954
        %v956 = vpop.xlane.xlu0 %955
        %v957 = vadd.f32 %v896, %v898
        %958 = vadd.xlane.f32.xlu0 %v957
        %v959 = vpop.xlane.xlu0 %958
        %v960 = vadd.f32 %v900, %v902
        %961 = vadd.xlane.f32.xlu0 %v960
        %v962 = vpop.xlane.xlu0 %961
        %v963 = vadd.f32 %v904, %v906
        %964 = vadd.xlane.f32.xlu0 %v963
        %v965 = vpop.xlane.xlu0 %964
        %v966 = vadd.f32 %v908, %v910
        %967 = vadd.xlane.f32.xlu0 %v966
        %v968 = vpop.xlane.xlu0 %967
        %v969 = vadd.f32 %v912, %v914
        %970 = vadd.xlane.f32.xlu0 %v969
        %v971 = vpop.xlane.xlu0 %970
        %v972 = vadd.f32 %v916, %v918
        %973 = vadd.xlane.f32.xlu0 %v972
        %v974 = vpop.xlane.xlu0 %973
        %v975 = vadd.f32 %v920, %v922
        %976 = vadd.xlane.f32.xlu0 %v975
        %v977 = vpop.xlane.xlu0 %976
        %v978 = vadd.f32 %v924, %v926
        %979 = vadd.xlane.f32.xlu0 %v978
        %v980 = vpop.xlane.xlu0 %979
        %v981 = vadd.f32 %v928, %v930
        %982 = vadd.xlane.f32.xlu0 %v981
        %v983 = vpop.xlane.xlu0 %982
        %v984 = vadd.f32 %v932, %v934
        %985 = vadd.xlane.f32.xlu0 %v984
        %v986 = vpop.xlane.xlu0 %985
        %v987 = vadd.f32 %v936, %v938
        %988 = vadd.xlane.f32.xlu0 %v987
        %v989 = vpop.xlane.xlu0 %988
        %v990 = vadd.f32 %v940, %v942
        %991 = vadd.xlane.f32.xlu0 %v990
        %v992 = vpop.xlane.xlu0 %991
        %v993 = vadd.f32 %v944, %v946
        %994 = vadd.xlane.f32.xlu0 %v993
        %v995 = vpop.xlane.xlu0 %994
        %v996 = vadd.f32 %v948, %v950
        %997 = vadd.xlane.f32.xlu0 %v996
        %v998 = vpop.xlane.xlu0 %997
        %v999 = vlog2.pop %v953
        %v1000 = vmul.f32 %v999, 0.6931472
        %v1001 = vlog2.pop %v956
        %v1002 = vmul.f32 %v1001, 0.6931472
        %v1003 = vlog2.pop %v959
        %v1004 = vmul.f32 %v1003, 0.6931472
        %v1005 = vlog2.pop %v962
        %v1006 = vmul.f32 %v1005, 0.6931472
        %v1007 = vlog2.pop %v965
        %v1008 = vmul.f32 %v1007, 0.6931472
        %v1009 = vlog2.pop %v968
        %v1010 = vmul.f32 %v1009, 0.6931472
        %v1011 = vlog2.pop %v971
        %v1012 = vmul.f32 %v1011, 0.6931472
        %v1013 = vlog2.pop %v974
        %v1014 = vmul.f32 %v1013, 0.6931472
        %v1015 = vlog2.pop %v977
        %v1016 = vmul.f32 %v1015, 0.6931472
        %v1017 = vlog2.pop %v980
        %v1018 = vmul.f32 %v1017, 0.6931472
        %v1019 = vlog2.pop %v983
        %v1020 = vmul.f32 %v1019, 0.6931472
        %v1021 = vlog2.pop %v986
        %v1022 = vmul.f32 %v1021, 0.6931472
        %v1023 = vlog2.pop %v989
        %v1024 = vmul.f32 %v1023, 0.6931472
        %v1025 = vlog2.pop %v992
        %v1026 = vmul.f32 %v1025, 0.6931472
        %v1027 = vlog2.pop %v995
        %v1028 = vmul.f32 %v1027, 0.6931472
        %v1029 = vlog2.pop %v998
        %v1030 = vmul.f32 %v1029, 0.6931472
        %v1031 = vadd.f32 %v809, %v1000
        %v1032 = vadd.f32 %v812, %v1002
        %v1033 = vadd.f32 %v815, %v1004
        %v1034 = vadd.f32 %v818, %v1006
        %v1035 = vadd.f32 %v821, %v1008
        %v1036 = vadd.f32 %v824, %v1010
        %v1037 = vadd.f32 %v827, %v1012
        %v1038 = vadd.f32 %v830, %v1014
        %v1039 = vadd.f32 %v833, %v1016
        %v1040 = vadd.f32 %v836, %v1018
        %v1041 = vadd.f32 %v839, %v1020
        %v1042 = vadd.f32 %v842, %v1022
        %v1043 = vadd.f32 %v845, %v1024
        %v1044 = vadd.f32 %v848, %v1026
        %v1045 = vadd.f32 %v851, %v1028
        %v1046 = vadd.f32 %v854, %v1030
        %v1047 = vld [vmem:[%s303] sm:$0xff]
        %v1048 = vld [vmem:[%s303 + $0x8] sm:$0xff]
        %v1049 = vld [vmem:[%s303 + $0x10] sm:$0xff]
        %v1050 = vld [vmem:[%s303 + $0x18] sm:$0xff]
        %v1051 = vld [vmem:[%s303 + $0x20] sm:$0xff]
        %v1052 = vld [vmem:[%s303 + $0x28] sm:$0xff]
        %v1053 = vld [vmem:[%s303 + $0x30] sm:$0xff]
        %v1054 = vld [vmem:[%s303 + $0x38] sm:$0xff]
        %v1055 = vld [vmem:[%s303 + $0x40] sm:$0xff]
        %v1056 = vld [vmem:[%s303 + $0x48] sm:$0xff]
        %v1057 = vld [vmem:[%s303 + $0x50] sm:$0xff]
        %v1058 = vld [vmem:[%s303 + $0x58] sm:$0xff]
        %v1059 = vld [vmem:[%s303 + $0x60] sm:$0xff]
        %v1060 = vld [vmem:[%s303 + $0x68] sm:$0xff]
        %v1061 = vld [vmem:[%s303 + $0x70] sm:$0xff]
        %v1062 = vld [vmem:[%s303 + $0x78] sm:$0xff]
        %v1063 = vsel %vm366, %v1047, 0.0
        %v1064 = vsel %vm367, %v1048, 0.0
        %v1065 = vsel %vm368, %v1049, 0.0
        %v1066 = vsel %vm369, %v1050, 0.0
        %v1067 = vsel %vm370, %v1051, 0.0
        %v1068 = vsel %vm371, %v1052, 0.0
        %v1069 = vsel %vm372, %v1053, 0.0
        %v1070 = vsel %vm373, %v1054, 0.0
        %v1071 = vsel %vm374, %v1055, 0.0
        %v1072 = vsel %vm375, %v1056, 0.0
        %v1073 = vsel %vm376, %v1057, 0.0
        %v1074 = vsel %vm377, %v1058, 0.0
        %v1075 = vsel %vm378, %v1059, 0.0
        %v1076 = vsel %vm379, %v1060, 0.0
        %v1077 = vsel %vm380, %v1061, 0.0
        %v1078 = vsel %vm381, %v1062, 0.0
        %1079 = vadd.xlane.f32.xlu0 %v1063
        %v1080 = vpop.xlane.xlu0 %1079
        %1081 = vadd.xlane.f32.xlu0 %v1064
        %v1082 = vpop.xlane.xlu0 %1081
        %1083 = vadd.xlane.f32.xlu0 %v1065
        %v1084 = vpop.xlane.xlu0 %1083
        %1085 = vadd.xlane.f32.xlu0 %v1066
        %v1086 = vpop.xlane.xlu0 %1085
        %1087 = vadd.xlane.f32.xlu0 %v1067
        %v1088 = vpop.xlane.xlu0 %1087
        %1089 = vadd.xlane.f32.xlu0 %v1068
        %v1090 = vpop.xlane.xlu0 %1089
        %1091 = vadd.xlane.f32.xlu0 %v1069
        %v1092 = vpop.xlane.xlu0 %1091
        %1093 = vadd.xlane.f32.xlu0 %v1070
        %v1094 = vpop.xlane.xlu0 %1093
        %1095 = vadd.xlane.f32.xlu0 %v1071
        %v1096 = vpop.xlane.xlu0 %1095
        %1097 = vadd.xlane.f32.xlu0 %v1072
        %v1098 = vpop.xlane.xlu0 %1097
        %1099 = vadd.xlane.f32.xlu0 %v1073
        %v1100 = vpop.xlane.xlu0 %1099
        %1101 = vadd.xlane.f32.xlu0 %v1074
        %v1102 = vpop.xlane.xlu0 %1101
        %1103 = vadd.xlane.f32.xlu0 %v1075
        %v1104 = vpop.xlane.xlu0 %1103
        %1105 = vadd.xlane.f32.xlu0 %v1076
        %v1106 = vpop.xlane.xlu0 %1105
        %1107 = vadd.xlane.f32.xlu0 %v1077
        %v1108 = vpop.xlane.xlu0 %1107
        %1109 = vadd.xlane.f32.xlu0 %v1078
        %v1110 = vpop.xlane.xlu0 %1109
        %v1111 = vsub.f32 %v1031, %v1080
        %v1112 = vsub.f32 %v1032, %v1082
        %v1113 = vsub.f32 %v1033, %v1084
        %v1114 = vsub.f32 %v1034, %v1086
        %v1115 = vsub.f32 %v1035, %v1088
        %v1116 = vsub.f32 %v1036, %v1090
        %v1117 = vsub.f32 %v1037, %v1092
        %v1118 = vsub.f32 %v1038, %v1094
        %v1119 = vsub.f32 %v1039, %v1096
        %v1120 = vsub.f32 %v1040, %v1098
        %v1121 = vsub.f32 %v1041, %v1100
        %v1122 = vsub.f32 %v1042, %v1102
        %v1123 = vsub.f32 %v1043, %v1104
        %v1124 = vsub.f32 %v1044, %v1106
        %v1125 = vsub.f32 %v1045, %v1108
        %v1126 = vsub.f32 %v1046, %v1110
        %v1127 = vsel %vm734, %v1111, 0.0
        %v1128 = vsel %vm734, %v1112, 0.0
        %v1129 = vadd.f32 %v1127, %v1128
        %v1130 = vsel %vm734, %v1113, 0.0
        %v1131 = vadd.f32 %v1129, %v1130
        %v1132 = vsel %vm734, %v1114, 0.0
        %v1133 = vadd.f32 %v1131, %v1132
        %v1134 = vsel %vm734, %v1115, 0.0
        %v1135 = vadd.f32 %v1133, %v1134
        %v1136 = vsel %vm734, %v1116, 0.0
        %v1137 = vadd.f32 %v1135, %v1136
        %v1138 = vsel %vm734, %v1117, 0.0
        %v1139 = vadd.f32 %v1137, %v1138
        %v1140 = vsel %vm734, %v1118, 0.0
        %v1141 = vadd.f32 %v1139, %v1140
        %v1142 = vsel %vm734, %v1119, 0.0
        %v1143 = vadd.f32 %v1141, %v1142
        %v1144 = vsel %vm734, %v1120, 0.0
        %v1145 = vadd.f32 %v1143, %v1144
        %v1146 = vsel %vm734, %v1121, 0.0
        %v1147 = vadd.f32 %v1145, %v1146
        %v1148 = vsel %vm734, %v1122, 0.0
        %v1149 = vadd.f32 %v1147, %v1148
        %v1150 = vsel %vm734, %v1123, 0.0
        %v1151 = vadd.f32 %v1149, %v1150
        %v1152 = vsel %vm734, %v1124, 0.0
        %v1153 = vadd.f32 %v1151, %v1152
        %v1154 = vsel %vm734, %v1125, 0.0
        %v1155 = vadd.f32 %v1153, %v1154
        %v1156 = vsel %vm734, %v1126, 0.0
        %v1157 = vadd.f32 %v1155, %v1156
        %1158 = vadd.xlane.f32.xlu0 %v1157
        %v1159 = vpop.xlane.xlu0 %1158
        %v1160 = vrot.slane %v1159, 4
        %v1161 = vadd.f32 %v1159, %v1160
        %v1162 = vrot.slane %v1161, 2
        %v1163 = vadd.f32 %v1161, %v1162
        %v1164 = vrot.slane %v1163, 1
        %v1165 = vadd.f32 %v1163, %v1164
        %s1166 = vtos %v1165
        %s1167 = sadd.f32 %s774, %s1166
        %v1168 = vstv %s1167
        %1169 = vst [vmem:[%s342] sm:$0xff] %v1168
        %s1170 = sand.u32 %s143, 1
        %s1171 = scalar_lea.sflag [#allocation4], %s1170
        %s1172 = sand.u32 %s143, 1
        %s1173 = smul.addr %s1172, 8
        %s1174 = scalar_lea.vmem [#allocation10], %s1173
        // Predicated region
        $region53: #{tpu_custom_call.1} parent=35 // pred_check
          %p1175 = pneg %p153
        $region54: #{tpu_custom_call.1} parent=35 // pred_check_branch
          %1177 = sbr.rel (%p1175) target = $region56
        $region55: #{tpu_custom_call.1} parent=35 // pred_region
          %s1179 = ssub.s32 128, 128
          %1180 = vsyncadd %s1171, %s1179
          %s1181 = smul.addr %s27, 128
          %s1182 = scalar_lea.hbm %s4, %s1181
          %s1184 = sshll.u32 %s1174, 4
          %s1185 = int_to_ptr.vmem [resolvable:$true] %s1184
          %1187 = dma.vmem_to_hbm [thread:$0]  %s1185, 128, %s1182, %s1171
        $region56: #{tpu_custom_call.1} parent=35 // pred_fallthru
          _
      $region36: #{tpu_custom_call.1} parent=5 // pred_fallthru
        _
      %p1188 = scmp.le.s32.totalorder 2, %s22
      // Predicated region
      $region57: #{tpu_custom_call.1} parent=5 // pred_check
        %p1189 = pneg %p1188
      $region58: #{tpu_custom_call.1} parent=5 // pred_check_branch
        %1191 = sbr.rel (%p1189) target = $region60
      $region59: #{tpu_custom_call.1} parent=5 // pred_region
        %s1192 = ssub.s32 %s22, 2
        // Predicated region
        $region61: #{tpu_custom_call.1} parent=59 // pred_check
          %p1193 = pneg %p159
        $region62: #{tpu_custom_call.1} parent=59 // pred_check_branch
          %1195 = sbr.rel (%p1193) target = $region64
        $region63: #{tpu_custom_call.1} parent=59 // pred_region
          %s1196 = sand.u32 %s144, 1
          %s1197 = scalar_lea.sflag [#allocation4], %s1196
          %s1198 = sand.u32 %s144, 1
          %s1199 = smul.addr %s1198, 8
          %s1200 = scalar_lea.vmem [#allocation10], %s1199
          %1201 = dma.done %s1197, 128
        $region64: #{tpu_custom_call.1} parent=59 // pred_fallthru
          _
      $region60: #{tpu_custom_call.1} parent=5 // pred_fallthru
        _
    $region6: #{tpu_custom_call.1} parent=1 // loop_footer
      %s26 = sadd.s32 1, %s22
    $region7: #{tpu_custom_call.1} parent=1 // loop_footer_branch
      %21 = sbr.rel target = $region3
    $region8: #{tpu_custom_call.1} parent=1 // loop_exit
      _
    %1202 = vsyncpa [#allocation3], 1
    %s1203 = scalar_lea.sflag [#allocation3], 1
    %1204 = vsyncpa %s1203, 1
    %1205 = vsyncpa [#allocation6], 1
    %s1206 = scalar_lea.sflag [#allocation6], 1
    %1207 = vsyncpa %s1206, 1
    %1208 = vsyncpa [#allocation9], 1
    %s1209 = scalar_lea.sflag [#allocation9], 1
    %1210 = vsyncpa %s1209, 1
    %1211 = vsyncpa [#allocation4], 1
    %s1212 = scalar_lea.sflag [#allocation4], 1
    %1213 = vsyncpa %s1212, 1

</llo_original>
